<compile_context>
chip_gen: v7x
topology: tpu7x:2x2x1
jax: 0.10.0
libtpu: 0.0.40
codegen_flags: <defaults>
</compile_context>

<pallas_src>
import functools

import jax
import jax.numpy as jnp
from jax.experimental import pallas as pl
from jax.experimental.pallas import tpu as pltpu

LANE = 128


def mlp_kernel(x_ref, w1_ref, b1_ref, w2_ref, b2_ref, w3_ref, b3_ref,
               y_ref, h2_ref):
    w_dtype = w1_ref.dtype                      # compute dtype for MXU inputs
    x = x_ref[...].astype(w_dtype)              # cast on load (no wrapper astype)

    # h1 = relu(x @ W1 + b1)   -- accumulate in f32, epilogue in f32
    h1 = jnp.dot(x, w1_ref[...], preferred_element_type=jnp.float32)
    h1 = jnp.maximum(h1 + b1_ref[...], 0.0)

    # h2 = relu(h1 @ W2 + b2)
    h2 = jnp.dot(h1.astype(w_dtype), w2_ref[...],
                 preferred_element_type=jnp.float32)
    h2 = jnp.maximum(h2 + b2_ref[...], 0.0)

    # y = h2 @ W3 + b3
    y = jnp.dot(h2.astype(w_dtype), w3_ref[...],
                preferred_element_type=jnp.float32)
    y = y + b3_ref[...]

    y_ref[...] = y.astype(y_ref.dtype)          # lane-dense (padded to 128)
    h2_ref[...] = h2.astype(h2_ref.dtype)       # lane-dense (padded to 128)


def _round_up(n, m=LANE):
    return ((n + m - 1) // m) * m


def prepare_params(params, compute_dtype=jnp.float32):
    """One-time prep: transpose PyTorch (out, in) weights to (in, out),
    zero-pad hidden/output widths to 128 lanes, cast weights to compute dtype.
    Biases stay f32 (epilogue runs in the f32 accumulator)."""
    w1, b1, w2, b2, w3, b3 = params
    input_dim = w1.shape[1]
    hidden_in, hidden_out, output_dim = w1.shape[0], w2.shape[0], w3.shape[0]
    h1p, h2p, op = _round_up(hidden_in), _round_up(hidden_out), _round_up(output_dim)

    def pad2(a, rows, cols):
        out = jnp.zeros((rows, cols), a.dtype)
        return out.at[:a.shape[0], :a.shape[1]].set(a)

    w1t = pad2(w1.T, input_dim, h1p).astype(compute_dtype)
    w2t = pad2(w2.T, h1p, h2p).astype(compute_dtype)
    w3t = pad2(w3.T, h2p, op).astype(compute_dtype)
    b1r = pad2(b1.reshape(1, -1), 1, h1p).astype(jnp.float32)
    b2r = pad2(b2.reshape(1, -1), 1, h2p).astype(jnp.float32)
    b3r = pad2(b3.reshape(1, -1), 1, op).astype(jnp.float32)

    prepared = (w1t, b1r, w2t, b2r, w3t, b3r)
    dims = (hidden_out, output_dim)             # true (unpadded) output widths
    return prepared, dims


def mlp_forward(x, prepared, dims, *, tile_b=512):
    """x: (batch, ...) flattened to (batch, input_dim) like x.view(B, -1)."""
    hidden_out, output_dim = dims
    w1t, b1r, w2t, b2r, w3t, b3r = prepared

    batch = x.shape[0]
    x2d = x.reshape(batch, -1)                  # view-like reshape only, no cast
    in_dim = x2d.shape[1]
    h1p, h2p, op = w1t.shape[1], w2t.shape[1], w3t.shape[1]

    tb = min(tile_b, batch)
    grid = (pl.cdiv(batch, tb),)

    const = lambda i: (0, 0)                    # weights/biases resident in VMEM

    y_pad, h2_pad = pl.pallas_call(
        mlp_kernel,
        grid=grid,
        in_specs=[
            pl.BlockSpec((tb, in_dim), lambda i: (i, 0)),   # x streams by batch tile
            pl.BlockSpec((in_dim, h1p), const),
            pl.BlockSpec((1, h1p), const),
            pl.BlockSpec((h1p, h2p), const),
            pl.BlockSpec((1, h2p), const),
            pl.BlockSpec((h2p, op), const),
            pl.BlockSpec((1, op), const),
        ],
        out_specs=(
            pl.BlockSpec((tb, op), lambda i: (i, 0)),
            pl.BlockSpec((tb, h2p), lambda i: (i, 0)),
        ),
        out_shape=(
            jax.ShapeDtypeStruct((batch, op), jnp.float32),
            jax.ShapeDtypeStruct((batch, h2p), jnp.float32),
        ),
        compiler_params=pltpu.CompilerParams(
            dimension_semantics=("parallel",),   # shard batch tiles across TCs (v7x)
        ),
    )(x2d, w1t, b1r, w2t, b2r, w3t, b3r)

    # Padded columns are exactly zero; slice back to the module's true widths.
    return y_pad[:, :output_dim], h2_pad[:, :hidden_out]


def init_params(key, input_dim, output_dim, hidden_in, hidden_out):
    """Deterministic init mimicking nn.Linear (uniform +/- 1/sqrt(fan_in)),
    PyTorch-style (out, in) weight layout."""
    ks = jax.random.split(key, 6)

    def linear(kw, kb, fan_in, fan_out):
        bound = 1.0 / jnp.sqrt(fan_in)
        w = jax.random.uniform(kw, (fan_out, fan_in), jnp.float32, -bound, bound)
        b = jax.random.uniform(kb, (fan_out,), jnp.float32, -bound, bound)
        return w, b

    w1, b1 = linear(ks[0], ks[1], input_dim, hidden_in)
    w2, b2 = linear(ks[2], ks[3], hidden_in, hidden_out)
    w3, b3 = linear(ks[4], ks[5], hidden_out, output_dim)
    return (w1, b1, w2, b2, w3, b3)


if __name__ == "__main__":
    key = jax.random.PRNGKey(0)
    k_x, k_p = jax.random.split(key)

    # Small shapes: batch=2, input is a (4, 4, 4) feature map -> input_dim = 64.
    batch, C, H, W = 2, 4, 4, 4
    input_dim = C * H * W
    hidden_in, hidden_out, output_dim = 32, 32, 16

    x = jax.random.normal(k_x, (batch, C, H, W), jnp.float32)
    params = init_params(k_p, input_dim, output_dim, hidden_in, hidden_out)

    # Reference in plain JAX (same math as the PyTorch module).
    w1, b1, w2, b2, w3, b3 = params
    xf = x.reshape(batch, -1)
    h1_ref = jnp.maximum(xf @ w1.T + b1, 0.0)
    h2_ref = jnp.maximum(h1_ref @ w2.T + b2, 0.0)
    y_ref = h2_ref @ w3.T + b3

    fwd = jax.jit(mlp_forward, static_argnames=("dims", "tile_b"))

    # f32 path (tight check).
    prepared_f32, dims = prepare_params(params, compute_dtype=jnp.float32)
    y_pred, h2 = fwd(x, prepared_f32, dims=dims)
    jax.block_until_ready((y_pred, h2))
    assert y_pred.shape == (batch, output_dim) and h2.shape == (batch, hidden_out)
    assert jnp.allclose(y_pred, y_ref, atol=1e-5, rtol=1e-5)
    assert jnp.allclose(h2, h2_ref, atol=1e-5, rtol=1e-5)

    # bf16 MXU inputs + f32 accumulation (preferred on v6e/v7x), loose check.
    prepared_bf16, dims = prepare_params(params, compute_dtype=jnp.bfloat16)
    y_bf, h2_bf = fwd(x, prepared_bf16, dims=dims)
    jax.block_until_ready((y_bf, h2_bf))
    assert jnp.allclose(y_bf, y_ref, atol=5e-2, rtol=5e-2)
    assert jnp.allclose(h2_bf, h2_ref, atol=5e-2, rtol=5e-2)

    print("KERNEL_OK")
</pallas_src>

<mosaic_0001>
module attributes {stable_mosaic.version = 11 : i64} {
  func.func @mlp_kernel(%arg0: i32, %arg1: memref<2x64xf32, #tpu.memory_space<vmem>>, %arg2: memref<64x128xf32, #tpu.memory_space<vmem>>, %arg3: memref<1x128xf32, #tpu.memory_space<vmem>>, %arg4: memref<128x128xf32, #tpu.memory_space<vmem>>, %arg5: memref<1x128xf32, #tpu.memory_space<vmem>>, %arg6: memref<128x128xf32, #tpu.memory_space<vmem>>, %arg7: memref<1x128xf32, #tpu.memory_space<vmem>>, %arg8: memref<2x128xf32, #tpu.memory_space<vmem>>, %arg9: memref<2x128xf32, #tpu.memory_space<vmem>>) attributes {dimension_semantics = [#tpu.dimension_semantics<parallel>], iteration_bounds = array<i64: 1>, scalar_prefetch = 0 : i64, scratch_operands = 0 : i64, tpu.core_type = #tpu.core_type<tc>, window_params = [{transform_indices = @transform_0, window_bounds = array<i64: 2, 64>}, {pipeline_mode = #tpu.pipeline_mode<synchronous>, transform_indices = @transform_1, window_bounds = array<i64: 64, 128>}, {pipeline_mode = #tpu.pipeline_mode<synchronous>, transform_indices = @transform_2, window_bounds = array<i64: 1, 128>}, {pipeline_mode = #tpu.pipeline_mode<synchronous>, transform_indices = @transform_3, window_bounds = array<i64: 128, 128>}, {pipeline_mode = #tpu.pipeline_mode<synchronous>, transform_indices = @transform_4, window_bounds = array<i64: 1, 128>}, {pipeline_mode = #tpu.pipeline_mode<synchronous>, transform_indices = @transform_5, window_bounds = array<i64: 128, 128>}, {pipeline_mode = #tpu.pipeline_mode<synchronous>, transform_indices = @transform_6, window_bounds = array<i64: 1, 128>}, {transform_indices = @transform_7, window_bounds = array<i64: 2, 128>}, {transform_indices = @transform_8, window_bounds = array<i64: 2, 128>}]} {
    %c0 = arith.constant 0 : index
    %c0_0 = arith.constant 0 : index
    %0 = vector.load %arg1[%c0, %c0_0] : memref<2x64xf32, #tpu.memory_space<vmem>>, vector<2x64xf32>
    %c0_1 = arith.constant 0 : index
    %c0_2 = arith.constant 0 : index
    %1 = vector.load %arg2[%c0_1, %c0_2] : memref<64x128xf32, #tpu.memory_space<vmem>>, vector<64x128xf32>
    %cst = arith.constant dense<0.000000e+00> : vector<2x128xf32>
    %2 = tpu.matmul %0, %1, %cst {dimension_numbers = #tpu.dot_dimension_numbers<[1], [0], [0], [1], [0, 0, 1, 1], [], []>} : vector<2x64xf32>, vector<64x128xf32>, vector<2x128xf32> -> vector<2x128xf32>
    %c0_3 = arith.constant 0 : index
    %c0_4 = arith.constant 0 : index
    %3 = vector.load %arg3[%c0_3, %c0_4] : memref<1x128xf32, #tpu.memory_space<vmem>>, vector<1x128xf32>
    %4 = vector.broadcast %3 : vector<1x128xf32> to vector<2x128xf32>
    %5 = arith.addf %2, %4 : vector<2x128xf32>
    %cst_5 = arith.constant 0.000000e+00 : f32
    %6 = vector.broadcast %cst_5 : f32 to vector<2x128xf32>
    %7 = arith.maximumf %5, %6 : vector<2x128xf32>
    %c0_6 = arith.constant 0 : index
    %c0_7 = arith.constant 0 : index
    %8 = vector.load %arg4[%c0_6, %c0_7] : memref<128x128xf32, #tpu.memory_space<vmem>>, vector<128x128xf32>
    %cst_8 = arith.constant dense<0.000000e+00> : vector<2x128xf32>
    %9 = tpu.matmul %7, %8, %cst_8 {dimension_numbers = #tpu.dot_dimension_numbers<[1], [0], [0], [1], [0, 0, 1, 1], [], []>} : vector<2x128xf32>, vector<128x128xf32>, vector<2x128xf32> -> vector<2x128xf32>
    %c0_9 = arith.constant 0 : index
    %c0_10 = arith.constant 0 : index
    %10 = vector.load %arg5[%c0_9, %c0_10] : memref<1x128xf32, #tpu.memory_space<vmem>>, vector<1x128xf32>
    %11 = vector.broadcast %10 : vector<1x128xf32> to vector<2x128xf32>
    %12 = arith.addf %9, %11 : vector<2x128xf32>
    %cst_11 = arith.constant 0.000000e+00 : f32
    %13 = vector.broadcast %cst_11 : f32 to vector<2x128xf32>
    %14 = arith.maximumf %12, %13 : vector<2x128xf32>
    %c0_12 = arith.constant 0 : index
    %c0_13 = arith.constant 0 : index
    %15 = vector.load %arg6[%c0_12, %c0_13] : memref<128x128xf32, #tpu.memory_space<vmem>>, vector<128x128xf32>
    %cst_14 = arith.constant dense<0.000000e+00> : vector<2x128xf32>
    %16 = tpu.matmul %14, %15, %cst_14 {dimension_numbers = #tpu.dot_dimension_numbers<[1], [0], [0], [1], [0, 0, 1, 1], [], []>} : vector<2x128xf32>, vector<128x128xf32>, vector<2x128xf32> -> vector<2x128xf32>
    %c0_15 = arith.constant 0 : index
    %c0_16 = arith.constant 0 : index
    %17 = vector.load %arg7[%c0_15, %c0_16] : memref<1x128xf32, #tpu.memory_space<vmem>>, vector<1x128xf32>
    %18 = vector.broadcast %17 : vector<1x128xf32> to vector<2x128xf32>
    %19 = arith.addf %16, %18 : vector<2x128xf32>
    %c0_17 = arith.constant 0 : index
    %c0_18 = arith.constant 0 : index
    %20 = vector.load %arg8[%c0_17, %c0_18] : memref<2x128xf32, #tpu.memory_space<vmem>>, vector<2x128xf32>
    tpu.vector_store %arg8[%c0_17, %c0_18], %19 {strides = array<i32>} : memref<2x128xf32, #tpu.memory_space<vmem>>, vector<2x128xf32>,
    %c0_19 = arith.constant 0 : index
    %c0_20 = arith.constant 0 : index
    %21 = vector.load %arg9[%c0_19, %c0_20] : memref<2x128xf32, #tpu.memory_space<vmem>>, vector<2x128xf32>
    tpu.vector_store %arg9[%c0_19, %c0_20], %14 {strides = array<i32>} : memref<2x128xf32, #tpu.memory_space<vmem>>, vector<2x128xf32>,
    return
  }
  func.func @transform_0(%arg0: i32) -> (i32, i32) {
    %c0_i32 = arith.constant 0 : i32
    %c0_i32_0 = arith.constant 0 : i32
    return %arg0, %c0_i32 : i32, i32
  }
  func.func @transform_1(%arg0: i32) -> (i32, i32) {
    %c0_i32 = arith.constant 0 : i32
    %c0_i32_0 = arith.constant 0 : i32
    %c0_i32_1 = arith.constant 0 : i32
    return %c0_i32, %c0_i32_0 : i32, i32
  }
  func.func @transform_2(%arg0: i32) -> (i32, i32) {
    %c0_i32 = arith.constant 0 : i32
    %c0_i32_0 = arith.constant 0 : i32
    %c0_i32_1 = arith.constant 0 : i32
    return %c0_i32, %c0_i32_0 : i32, i32
  }
  func.func @transform_3(%arg0: i32) -> (i32, i32) {
    %c0_i32 = arith.constant 0 : i32
    %c0_i32_0 = arith.constant 0 : i32
    %c0_i32_1 = arith.constant 0 : i32
    return %c0_i32, %c0_i32_0 : i32, i32
  }
  func.func @transform_4(%arg0: i32) -> (i32, i32) {
    %c0_i32 = arith.constant 0 : i32
    %c0_i32_0 = arith.constant 0 : i32
    %c0_i32_1 = arith.constant 0 : i32
    return %c0_i32, %c0_i32_0 : i32, i32
  }
  func.func @transform_5(%arg0: i32) -> (i32, i32) {
    %c0_i32 = arith.constant 0 : i32
    %c0_i32_0 = arith.constant 0 : i32
    %c0_i32_1 = arith.constant 0 : i32
    return %c0_i32, %c0_i32_0 : i32, i32
  }
  func.func @transform_6(%arg0: i32) -> (i32, i32) {
    %c0_i32 = arith.constant 0 : i32
    %c0_i32_0 = arith.constant 0 : i32
    %c0_i32_1 = arith.constant 0 : i32
    return %c0_i32, %c0_i32_0 : i32, i32
  }
  func.func @transform_7(%arg0: i32) -> (i32, i32) {
    %c0_i32 = arith.constant 0 : i32
    %c0_i32_0 = arith.constant 0 : i32
    return %arg0, %c0_i32 : i32, i32
  }
  func.func @transform_8(%arg0: i32) -> (i32, i32) {
    %c0_i32 = arith.constant 0 : i32
    %c0_i32_0 = arith.constant 0 : i32
    return %arg0, %c0_i32 : i32, i32
  }
}

</mosaic_0001>

<llo_original>
// kernel: mlp_forward.1
$region0: #{mlp_forward.1}
  #allocation0 [shape = 'u32[]', space=smem, size = 0x4, offset = 0x4, fixed_abs, tag = 'smem constant byte address 0x4 - core index']
  #allocation1 [shape = 'u32[144,128]{1,0:T(1,128)}', space=vmem, size = 0x12000, scoped, tag = 'internal scratch']
  %s0 = inlined_call_operand.vmem [shape: f32[2,64], index: 0, kind: input, shape index: {}]
  %s1 = inlined_call_operand.hbm [shape: f32[64,128], index: 1, kind: input, shape index: {}]
  %s2 = inlined_call_operand.vmem [shape: f32[1,128], index: 2, kind: input, shape index: {}]
  %s3 = inlined_call_operand.hbm [shape: f32[128,128], index: 3, kind: input, shape index: {}]
  %s4 = inlined_call_operand.vmem [shape: f32[1,128], index: 4, kind: input, shape index: {}]
  %s5 = inlined_call_operand.hbm [shape: f32[128,128], index: 5, kind: input, shape index: {}]
  %s6 = inlined_call_operand.vmem [shape: f32[1,128], index: 6, kind: input, shape index: {}]
  %s7 = inlined_call_operand.hbm [shape: f32[2,128], index: 7, kind: output, shape index: {0}]
  %s8 = inlined_call_operand.hbm [shape: f32[2,128], index: 8, kind: output, shape index: {1}]
  %9 = xla_tuple %s7, %s8
  %s10 = sld [smem:[#allocation0]]
  $region58: #{mlp_forward.1} parent=0
    _
  %s12 = ssub.s32 1, %s10
  %s13 = scalar_select 0, %s12, %s10
  $region1: #{mlp_forward.1} parent=0
    #allocation2 [shape = 'u8[32768]{0}', space=vmem, size = 0x8000, scoped, tag = 'input window, operand 1, single buffered']
    #allocation3 [shape = 's32[1]{0}', space=sflag, size = 0x4, scoped, tag = 'scoped memory for mlp_forward.1']
    #allocation4 [shape = 's32[1]{0}', space=sflag, size = 0x4, scoped, tag = 'scoped memory for mlp_forward.1']
    #allocation5 [shape = 'u8[65536]{0}', space=vmem, size = 0x10000, scoped, tag = 'input window, operand 3, single buffered']
    #allocation6 [shape = 's32[1]{0}', space=sflag, size = 0x4, scoped, tag = 'scoped memory for mlp_forward.1']
    #allocation7 [shape = 'u8[65536]{0}', space=vmem, size = 0x10000, scoped, tag = 'input window, operand 5, single buffered']
    #allocation8 [shape = 'u8[1024]{0}', space=vmem, size = 0x400, scoped, tag = 'output window, operand 0, single buffered']
    #allocation9 [shape = 'u8[1024]{0}', space=vmem, size = 0x400, scoped, tag = 'output window, operand 1, single buffered']
    #allocation10 [shape = 's32[1]{0}', space=sflag, size = 0x4, scoped, tag = 'scoped memory for mlp_forward.1']
    %14 = vsyncpa [#allocation3], 0
    %15 = vsyncpa [#allocation6], 0
    %16 = vsyncpa [#allocation4], 0
    %17 = vsyncpa [#allocation10], 0
    // Predicated region
    $region2: #{mlp_forward.1} parent=1 // pred_check
      _
    $region3: #{mlp_forward.1} parent=1 // pred_check_branch
      %19 = sbr.rel (0) target = $region5
    $region4: #{mlp_forward.1} parent=1 // pred_region
      _
    $region5: #{mlp_forward.1} parent=1 // pred_fallthru
      _
    // Predicated region
    $region6: #{mlp_forward.1} parent=1 // pred_check
      _
    $region7: #{mlp_forward.1} parent=1 // pred_check_branch
      %21 = sbr.rel (0) target = $region9
    $region8: #{mlp_forward.1} parent=1 // pred_region
      %s23 = ssub.s32 1024, 1024
      %24 = vsyncadd [#allocation3], %s23
      %s25 = sshll.u32 [#allocation2], 4
      %s26 = int_to_ptr.vmem [resolvable:$true] %s25
      %31 = dma.hbm_to_vmem [thread:$0]  %s1, 1024, %s26, [#allocation3], 128, 128, 8
    $region9: #{mlp_forward.1} parent=1 // pred_fallthru
      _
    // Predicated region
    $region10: #{mlp_forward.1} parent=1 // pred_check
      _
    $region11: #{mlp_forward.1} parent=1 // pred_check_branch
      %33 = sbr.rel (0) target = $region13
    $region12: #{mlp_forward.1} parent=1 // pred_region
      _
    $region13: #{mlp_forward.1} parent=1 // pred_fallthru
      _
    // Predicated region
    $region14: #{mlp_forward.1} parent=1 // pred_check
      _
    $region15: #{mlp_forward.1} parent=1 // pred_check_branch
      %35 = sbr.rel (0) target = $region17
    $region16: #{mlp_forward.1} parent=1 // pred_region
      %s37 = ssub.s32 2048, 2048
      %38 = vsyncadd [#allocation6], %s37
      %s39 = sshll.u32 [#allocation5], 4
      %s40 = int_to_ptr.vmem [resolvable:$true] %s39
      %45 = dma.hbm_to_vmem [thread:$0]  %s3, 2048, %s40, [#allocation6], 128, 128, 8
    $region17: #{mlp_forward.1} parent=1 // pred_fallthru
      _
    // Predicated region
    $region18: #{mlp_forward.1} parent=1 // pred_check
      _
    $region19: #{mlp_forward.1} parent=1 // pred_check_branch
      %47 = sbr.rel (0) target = $region21
    $region20: #{mlp_forward.1} parent=1 // pred_region
      _
    $region21: #{mlp_forward.1} parent=1 // pred_fallthru
      _
    // Predicated region
    $region22: #{mlp_forward.1} parent=1 // pred_check
      _
    $region23: #{mlp_forward.1} parent=1 // pred_check_branch
      %49 = sbr.rel (0) target = $region25
    $region24: #{mlp_forward.1} parent=1 // pred_region
      %s51 = ssub.s32 2048, 2048
      %52 = vsyncadd [#allocation6], %s51
      %s53 = sshll.u32 [#allocation7], 4
      %s54 = int_to_ptr.vmem [resolvable:$true] %s53
      %59 = dma.hbm_to_vmem [thread:$0]  %s5, 2048, %s54, [#allocation6], 128, 128, 8
    $region25: #{mlp_forward.1} parent=1 // pred_fallthru
      _
    // Predicated region
    $region26: #{mlp_forward.1} parent=1 // pred_check
      _
    $region27: #{mlp_forward.1} parent=1 // pred_check_branch
      %61 = sbr.rel (0) target = $region29
    $region28: #{mlp_forward.1} parent=1 // pred_region
      _
    $region29: #{mlp_forward.1} parent=1 // pred_fallthru
      _
    // Predicated region
    $region30: #{mlp_forward.1} parent=1 // pred_check
      _
    $region31: #{mlp_forward.1} parent=1 // pred_check_branch
      %63 = sbr.rel (0) target = $region33
    $region32: #{mlp_forward.1} parent=1 // pred_region
      %64 = dma.done [#allocation3], 1024
    $region33: #{mlp_forward.1} parent=1 // pred_fallthru
      _
    // Predicated region
    $region34: #{mlp_forward.1} parent=1 // pred_check
      _
    $region35: #{mlp_forward.1} parent=1 // pred_check_branch
      %66 = sbr.rel (0) target = $region37
    $region36: #{mlp_forward.1} parent=1 // pred_region
      %67 = dma.done [#allocation6], 2048
    $region37: #{mlp_forward.1} parent=1 // pred_fallthru
      _
    // Predicated region
    $region38: #{mlp_forward.1} parent=1 // pred_check
      _
    $region39: #{mlp_forward.1} parent=1 // pred_check_branch
      %69 = sbr.rel (0) target = $region41
    $region40: #{mlp_forward.1} parent=1 // pred_region
      %70 = dma.done [#allocation6], 2048
    $region41: #{mlp_forward.1} parent=1 // pred_fallthru
      _
    %v71 = vld [vmem:[%s0] sm:$0x3]
    %v72 = vld [vmem:[#allocation2] sm:$0xff]
    %v73 = vld [vmem:[#allocation2 + $0x8] sm:$0xff]
    %v74 = vld [vmem:[#allocation2 + $0x10] sm:$0xff]
    %v75 = vld [vmem:[#allocation2 + $0x18] sm:$0xff]
    %v76 = vld [vmem:[#allocation2 + $0x20] sm:$0xff]
    %v77 = vld [vmem:[#allocation2 + $0x28] sm:$0xff]
    %v78 = vld [vmem:[#allocation2 + $0x30] sm:$0xff]
    %v79 = vld [vmem:[#allocation2 + $0x38] sm:$0xff]
    %v80 = vld [vmem:[%s2] sm:$0x1]
    %v82 = vlaneseq
    %v83 = vshrl.u32 %v82, 7
    %v84 = vsub.s32 0, %v83
    %v85 = vrot.slane %v80, %v84
    %vm87 = vcmask 523264
    %v89 = vsel %vm87, %v71, 0
    %91 = vmatprep.subr.mxu0 0.0
    %92 = vmatpush1.msra.mxu0 %v72
    %93 = vmatprep.subr.mxu0 0.0
    %94 = vmatpush1.msra.mxu0 %v73
    %95 = vmatprep.subr.mxu0 0.0
    %96 = vmatpush1.msra.mxu0 %v74
    %97 = vmatprep.subr.mxu0 0.0
    %98 = vmatpush1.msra.mxu0 %v75
    %99 = vmatprep.subr.mxu0 0.0
    %100 = vmatpush1.msra.mxu0 %v76
    %101 = vmatprep.subr.mxu0 0.0
    %102 = vmatpush1.msra.mxu0 %v77
    %103 = vmatprep.subr.mxu0 0.0
    %104 = vmatpush1.msra.mxu0 %v78
    %105 = vmatprep.subr.mxu0 0.0
    %106 = vmatpush1.msra.mxu0 %v79
    %107 = vmatprep.subr.mxu0 0.0
    %108 = vmatpush1.msra.mxu0 0.0
    %109 = vmatprep.subr.mxu0 0.0
    %110 = vmatpush1.msra.mxu0 0.0
    %111 = vmatprep.subr.mxu0 0.0
    %112 = vmatpush1.msra.mxu0 0.0
    %113 = vmatprep.subr.mxu0 0.0
    %114 = vmatpush1.msra.mxu0 0.0
    %115 = vmatprep.subr.mxu0 0.0
    %116 = vmatpush1.msra.mxu0 0.0
    %117 = vmatprep.subr.mxu0 0.0
    %118 = vmatpush1.msra.mxu0 0.0
    %119 = vmatprep.subr.mxu0 0.0
    %120 = vmatpush1.msra.mxu0 0.0
    %121 = vmatprep.subr.mxu0 0.0
    %122 = vmatpush1.msra.mxu0 0.0
    %123 = vmatprep.subr.mxu0 0.0
    %124 = vmatpush1.msra.mxu0 0.0
    %125 = vmatprep.subr.mxu0 0.0
    %126 = vmatpush1.msra.mxu0 0.0
    %127 = vmatprep.subr.mxu0 0.0
    %128 = vmatpush1.msra.mxu0 0.0
    %129 = vmatprep.subr.mxu0 0.0
    %130 = vmatpush1.msra.mxu0 0.0
    %131 = vmatprep.subr.mxu0 0.0
    %132 = vmatpush1.msra.mxu0 0.0
    %133 = vmatprep.subr.mxu0 0.0
    %134 = vmatpush1.msra.mxu0 0.0
    %135 = vmatprep.subr.mxu0 0.0
    %136 = vmatpush1.msra.mxu0 0.0
    %137 = vmatprep.subr.mxu0 0.0
    %138 = vmatpush1.msra.mxu0 0.0
    %139 = vmatprep.subr.mxu0 0.0
    %140 = vmatpush1.msra.mxu0 0.0
    %141 = vmatprep.subr.mxu0 0.0
    %142 = vmatpush1.msra.mxu0 0.0
    %143 = vmatprep.subr.mxu0 0.0
    %144 = vmatpush1.msra.mxu0 0.0
    %145 = vmatprep.subr.mxu0 0.0
    %146 = vmatpush1.msra.mxu0 0.0
    %147 = vmatprep.subr.mxu0 0.0
    %148 = vmatpush1.msra.mxu0 0.0
    %149 = vmatprep.subr.mxu0 0.0
    %150 = vmatpush1.msra.mxu0 0.0
    %151 = vmatprep.subr.mxu0 0.0
    %152 = vmatpush1.msra.mxu0 0.0
    %153 = vmatprep.subr.mxu0 0.0
    %154 = vmatpush1.msra.mxu0 0.0
    %155 = vmatprep.mubr.f32.mxu0 0.0
    %156 = vmatmul.mubr.f32.gmra.mrb[0].mxu0 %v89
    %v157 = vpop.f32.mrb[0].mxu0
    %v158 = vadd.f32 %v85, %v157
    %v159 = vpop.f32.mrb[0].mxu0
    %160 = vdwg.mxu0
    %v161 = vmax.f32 %v158, 0.0
    %v162 = vld [vmem:[#allocation5] sm:$0xff]
    %v163 = vld [vmem:[#allocation5 + $0x8] sm:$0xff]
    %v164 = vld [vmem:[#allocation5 + $0x10] sm:$0xff]
    %v165 = vld [vmem:[#allocation5 + $0x18] sm:$0xff]
    %v166 = vld [vmem:[#allocation5 + $0x20] sm:$0xff]
    %v167 = vld [vmem:[#allocation5 + $0x28] sm:$0xff]
    %v168 = vld [vmem:[#allocation5 + $0x30] sm:$0xff]
    %v169 = vld [vmem:[#allocation5 + $0x38] sm:$0xff]
    %v170 = vld [vmem:[#allocation5 + $0x40] sm:$0xff]
    %v171 = vld [vmem:[#allocation5 + $0x48] sm:$0xff]
    %v172 = vld [vmem:[#allocation5 + $0x50] sm:$0xff]
    %v173 = vld [vmem:[#allocation5 + $0x58] sm:$0xff]
    %v174 = vld [vmem:[#allocation5 + $0x60] sm:$0xff]
    %v175 = vld [vmem:[#allocation5 + $0x68] sm:$0xff]
    %v176 = vld [vmem:[#allocation5 + $0x70] sm:$0xff]
    %v177 = vld [vmem:[#allocation5 + $0x78] sm:$0xff]
    %v178 = vld [vmem:[%s4] sm:$0x1]
    %v180 = vlaneseq
    %v181 = vshrl.u32 %v180, 7
    %v182 = vsub.s32 0, %v181
    %v183 = vrot.slane %v178, %v182
    %185 = vmatprep.subr.mxu0 0.0
    %186 = vmatpush1.msra.mxu0 %v162
    %187 = vmatprep.subr.mxu0 0.0
    %188 = vmatpush1.msra.mxu0 %v163
    %189 = vmatprep.subr.mxu0 0.0
    %190 = vmatpush1.msra.mxu0 %v164
    %191 = vmatprep.subr.mxu0 0.0
    %192 = vmatpush1.msra.mxu0 %v165
    %193 = vmatprep.subr.mxu0 0.0
    %194 = vmatpush1.msra.mxu0 %v166
    %195 = vmatprep.subr.mxu0 0.0
    %196 = vmatpush1.msra.mxu0 %v167
    %197 = vmatprep.subr.mxu0 0.0
    %198 = vmatpush1.msra.mxu0 %v168
    %199 = vmatprep.subr.mxu0 0.0
    %200 = vmatpush1.msra.mxu0 %v169
    %201 = vmatprep.subr.mxu0 0.0
    %202 = vmatpush1.msra.mxu0 %v170
    %203 = vmatprep.subr.mxu0 0.0
    %204 = vmatpush1.msra.mxu0 %v171
    %205 = vmatprep.subr.mxu0 0.0
    %206 = vmatpush1.msra.mxu0 %v172
    %207 = vmatprep.subr.mxu0 0.0
    %208 = vmatpush1.msra.mxu0 %v173
    %209 = vmatprep.subr.mxu0 0.0
    %210 = vmatpush1.msra.mxu0 %v174
    %211 = vmatprep.subr.mxu0 0.0
    %212 = vmatpush1.msra.mxu0 %v175
    %213 = vmatprep.subr.mxu0 0.0
    %214 = vmatpush1.msra.mxu0 %v176
    %215 = vmatprep.subr.mxu0 0.0
    %216 = vmatpush1.msra.mxu0 %v177
    %217 = vmatprep.subr.mxu0 0.0
    %218 = vmatpush1.msra.mxu0 0.0
    %219 = vmatprep.subr.mxu0 0.0
    %220 = vmatpush1.msra.mxu0 0.0
    %221 = vmatprep.subr.mxu0 0.0
    %222 = vmatpush1.msra.mxu0 0.0
    %223 = vmatprep.subr.mxu0 0.0
    %224 = vmatpush1.msra.mxu0 0.0
    %225 = vmatprep.subr.mxu0 0.0
    %226 = vmatpush1.msra.mxu0 0.0
    %227 = vmatprep.subr.mxu0 0.0
    %228 = vmatpush1.msra.mxu0 0.0
    %229 = vmatprep.subr.mxu0 0.0
    %230 = vmatpush1.msra.mxu0 0.0
    %231 = vmatprep.subr.mxu0 0.0
    %232 = vmatpush1.msra.mxu0 0.0
    %233 = vmatprep.subr.mxu0 0.0
    %234 = vmatpush1.msra.mxu0 0.0
    %235 = vmatprep.subr.mxu0 0.0
    %236 = vmatpush1.msra.mxu0 0.0
    %237 = vmatprep.subr.mxu0 0.0
    %238 = vmatpush1.msra.mxu0 0.0
    %239 = vmatprep.subr.mxu0 0.0
    %240 = vmatpush1.msra.mxu0 0.0
    %241 = vmatprep.subr.mxu0 0.0
    %242 = vmatpush1.msra.mxu0 0.0
    %243 = vmatprep.subr.mxu0 0.0
    %244 = vmatpush1.msra.mxu0 0.0
    %245 = vmatprep.subr.mxu0 0.0
    %246 = vmatpush1.msra.mxu0 0.0
    %247 = vmatprep.subr.mxu0 0.0
    %248 = vmatpush1.msra.mxu0 0.0
    %249 = vmatprep.mubr.f32.mxu0 0.0
    %250 = vmatmul.mubr.f32.gmra.mrb[0].mxu0 %v161
    %v251 = vpop.f32.mrb[0].mxu0
    %v252 = vadd.f32 %v183, %v251
    %v253 = vpop.f32.mrb[0].mxu0
    %254 = vdwg.mxu0
    %v255 = vmax.f32 %v252, 0.0
    %v256 = vld [vmem:[#allocation7] sm:$0xff]
    %v257 = vld [vmem:[#allocation7 + $0x8] sm:$0xff]
    %v258 = vld [vmem:[#allocation7 + $0x10] sm:$0xff]
    %v259 = vld [vmem:[#allocation7 + $0x18] sm:$0xff]
    %v260 = vld [vmem:[#allocation7 + $0x20] sm:$0xff]
    %v261 = vld [vmem:[#allocation7 + $0x28] sm:$0xff]
    %v262 = vld [vmem:[#allocation7 + $0x30] sm:$0xff]
    %v263 = vld [vmem:[#allocation7 + $0x38] sm:$0xff]
    %v264 = vld [vmem:[#allocation7 + $0x40] sm:$0xff]
    %v265 = vld [vmem:[#allocation7 + $0x48] sm:$0xff]
    %v266 = vld [vmem:[#allocation7 + $0x50] sm:$0xff]
    %v267 = vld [vmem:[#allocation7 + $0x58] sm:$0xff]
    %v268 = vld [vmem:[#allocation7 + $0x60] sm:$0xff]
    %v269 = vld [vmem:[#allocation7 + $0x68] sm:$0xff]
    %v270 = vld [vmem:[#allocation7 + $0x70] sm:$0xff]
    %v271 = vld [vmem:[#allocation7 + $0x78] sm:$0xff]
    %v272 = vld [vmem:[%s6] sm:$0x1]
    %v274 = vlaneseq
    %v275 = vshrl.u32 %v274, 7
    %v276 = vsub.s32 0, %v275
    %v277 = vrot.slane %v272, %v276
    %279 = vmatprep.subr.mxu0 0.0
    %280 = vmatpush1.msra.mxu0 %v256
    %281 = vmatprep.subr.mxu0 0.0
    %282 = vmatpush1.msra.mxu0 %v257
    %283 = vmatprep.subr.mxu0 0.0
    %284 = vmatpush1.msra.mxu0 %v258
    %285 = vmatprep.subr.mxu0 0.0
    %286 = vmatpush1.msra.mxu0 %v259
    %287 = vmatprep.subr.mxu0 0.0
    %288 = vmatpush1.msra.mxu0 %v260
    %289 = vmatprep.subr.mxu0 0.0
    %290 = vmatpush1.msra.mxu0 %v261
    %291 = vmatprep.subr.mxu0 0.0
    %292 = vmatpush1.msra.mxu0 %v262
    %293 = vmatprep.subr.mxu0 0.0
    %294 = vmatpush1.msra.mxu0 %v263
    %295 = vmatprep.subr.mxu0 0.0
    %296 = vmatpush1.msra.mxu0 %v264
    %297 = vmatprep.subr.mxu0 0.0
    %298 = vmatpush1.msra.mxu0 %v265
    %299 = vmatprep.subr.mxu0 0.0
    %300 = vmatpush1.msra.mxu0 %v266
    %301 = vmatprep.subr.mxu0 0.0
    %302 = vmatpush1.msra.mxu0 %v267
    %303 = vmatprep.subr.mxu0 0.0
    %304 = vmatpush1.msra.mxu0 %v268
    %305 = vmatprep.subr.mxu0 0.0
    %306 = vmatpush1.msra.mxu0 %v269
    %307 = vmatprep.subr.mxu0 0.0
    %308 = vmatpush1.msra.mxu0 %v270
    %309 = vmatprep.subr.mxu0 0.0
    %310 = vmatpush1.msra.mxu0 %v271
    %311 = vmatprep.subr.mxu0 0.0
    %312 = vmatpush1.msra.mxu0 0.0
    %313 = vmatprep.subr.mxu0 0.0
    %314 = vmatpush1.msra.mxu0 0.0
    %315 = vmatprep.subr.mxu0 0.0
    %316 = vmatpush1.msra.mxu0 0.0
    %317 = vmatprep.subr.mxu0 0.0
    %318 = vmatpush1.msra.mxu0 0.0
    %319 = vmatprep.subr.mxu0 0.0
    %320 = vmatpush1.msra.mxu0 0.0
    %321 = vmatprep.subr.mxu0 0.0
    %322 = vmatpush1.msra.mxu0 0.0
    %323 = vmatprep.subr.mxu0 0.0
    %324 = vmatpush1.msra.mxu0 0.0
    %325 = vmatprep.subr.mxu0 0.0
    %326 = vmatpush1.msra.mxu0 0.0
    %327 = vmatprep.subr.mxu0 0.0
    %328 = vmatpush1.msra.mxu0 0.0
    %329 = vmatprep.subr.mxu0 0.0
    %330 = vmatpush1.msra.mxu0 0.0
    %331 = vmatprep.subr.mxu0 0.0
    %332 = vmatpush1.msra.mxu0 0.0
    %333 = vmatprep.subr.mxu0 0.0
    %334 = vmatpush1.msra.mxu0 0.0
    %335 = vmatprep.subr.mxu0 0.0
    %336 = vmatpush1.msra.mxu0 0.0
    %337 = vmatprep.subr.mxu0 0.0
    %338 = vmatpush1.msra.mxu0 0.0
    %339 = vmatprep.subr.mxu0 0.0
    %340 = vmatpush1.msra.mxu0 0.0
    %341 = vmatprep.subr.mxu0 0.0
    %342 = vmatpush1.msra.mxu0 0.0
    %343 = vmatprep.mubr.f32.mxu0 0.0
    %344 = vmatmul.mubr.f32.gmra.mrb[0].mxu0 %v255
    %v345 = vpop.f32.mrb[0].mxu0
    %v346 = vadd.f32 %v277, %v345
    %v347 = vpop.f32.mrb[0].mxu0
    %348 = vdwg.mxu0
    %349 = vst [vmem:[#allocation8] sm:$0x3] %v346
    %350 = vst [vmem:[#allocation9] sm:$0x3] %v255
    // Predicated region
    $region42: #{mlp_forward.1} parent=1 // pred_check
      _
    $region43: #{mlp_forward.1} parent=1 // pred_check_branch
      %352 = sbr.rel (0) target = $region45
    $region44: #{mlp_forward.1} parent=1 // pred_region
      %s354 = ssub.s32 32, 32
      %355 = vsyncadd [#allocation4], %s354
      %s357 = sshll.u32 [#allocation8], 4
      %s358 = int_to_ptr.vmem [resolvable:$true] %s357
      %360 = dma.vmem_to_hbm [thread:$0]  %s358, 32, %s7, [#allocation4]
    $region45: #{mlp_forward.1} parent=1 // pred_fallthru
      _
    // Predicated region
    $region46: #{mlp_forward.1} parent=1 // pred_check
      _
    $region47: #{mlp_forward.1} parent=1 // pred_check_branch
      %362 = sbr.rel (0) target = $region49
    $region48: #{mlp_forward.1} parent=1 // pred_region
      %s364 = ssub.s32 32, 32
      %365 = vsyncadd [#allocation10], %s364
      %s367 = sshll.u32 [#allocation9], 4
      %s368 = int_to_ptr.vmem [resolvable:$true] %s367
      %370 = dma.vmem_to_hbm [thread:$0]  %s368, 32, %s8, [#allocation10]
    $region49: #{mlp_forward.1} parent=1 // pred_fallthru
      _
    // Predicated region
    $region50: #{mlp_forward.1} parent=1 // pred_check
      _
    $region51: #{mlp_forward.1} parent=1 // pred_check_branch
      %372 = sbr.rel (0) target = $region53
    $region52: #{mlp_forward.1} parent=1 // pred_region
      %373 = dma.done [#allocation4], 32
    $region53: #{mlp_forward.1} parent=1 // pred_fallthru
      _
    // Predicated region
    $region54: #{mlp_forward.1} parent=1 // pred_check
      _
    $region55: #{mlp_forward.1} parent=1 // pred_check_branch
      %375 = sbr.rel (0) target = $region57
    $region56: #{mlp_forward.1} parent=1 // pred_region
      %376 = dma.done [#allocation10], 32
    $region57: #{mlp_forward.1} parent=1 // pred_fallthru
      _
    %377 = vsyncpa [#allocation3], 1
    %378 = vsyncpa [#allocation6], 1
    %379 = vsyncpa [#allocation4], 1
    %380 = vsyncpa [#allocation10], 1

</llo_original>
